<compile_context>
chip_gen: v7x
topology: tpu7x:2x2x1
jax: 0.10.0
libtpu: 0.0.40
codegen_flags: <defaults>
</compile_context>

<pallas_src>
import jax
import jax.numpy as jnp
from jax.experimental import pallas as pl
from jax.experimental.pallas import tpu as pltpu

_K = 3  # nn.MaxPool2d(kernel_size=3): kernel 3, stride 3, no padding, floor mode


# ---------------------------------------------------------------------------
# Kernels
# ---------------------------------------------------------------------------
def _maxpool3x3_fast_kernel(x_ref, o_ref, yt_ref):
    """Vectorized 3x3 / stride-3 max pool.

    x_ref : (nc, H, W)   input tile (VMEM)
    o_ref : (nc, Ho, Wo) output tile (VMEM)
    yt_ref: (nc, W, Ho)  scratch: row-reduced tile, transposed so the column
                         reduction is also a stride-3 *sublane* access.
    """
    _, Ho, Wo = o_ref.shape

    # --- window-row max: three sublane-strided loads (rows 3r, 3r+1, 3r+2) ---
    r0 = x_ref[:, pl.ds(0, Ho, 3), :]
    r1 = x_ref[:, pl.ds(1, Ho, 3), :]
    r2 = x_ref[:, pl.ds(2, Ho, 3), :]
    y = jnp.maximum(jnp.maximum(r0, r1), r2)                 # (nc, Ho, W)

    # --- park W on the sublane axis so the column reduce is also stride-3 ---
    yt_ref[...] = jnp.swapaxes(y, 1, 2)                      # (nc, W, Ho)

    c0 = yt_ref[:, pl.ds(0, Wo, 3), :]
    c1 = yt_ref[:, pl.ds(1, Wo, 3), :]
    c2 = yt_ref[:, pl.ds(2, Wo, 3), :]
    zt = jnp.maximum(jnp.maximum(c0, c1), c2)                # (nc, Wo, Ho)

    o_ref[...] = jnp.swapaxes(zt, 1, 2).astype(o_ref.dtype)  # (nc, Ho, Wo)


def _maxpool3x3_safe_kernel(x_ref, o_ref, yt_ref):
    """Contiguous-slice fallback (previously validated lowering)."""
    del yt_ref  # unused
    _, Ho, Wo = o_ref.shape
    x = x_ref[...]

    rows = []
    for r in range(Ho):
        r0 = x[:, _K * r:_K * r + 1, :]
        r1 = x[:, _K * r + 1:_K * r + 2, :]
        r2 = x[:, _K * r + 2:_K * r + 3, :]
        rows.append(jnp.maximum(jnp.maximum(r0, r1), r2))
    y = rows[0] if Ho == 1 else jnp.concatenate(rows, axis=1)

    cols = []
    for c in range(Wo):
        c0 = y[:, :, _K * c:_K * c + 1]
        c1 = y[:, :, _K * c + 1:_K * c + 2]
        c2 = y[:, :, _K * c + 2:_K * c + 3]
        cols.append(jnp.maximum(jnp.maximum(c0, c1), c2))
    out = cols[0] if Wo == 1 else jnp.concatenate(cols, axis=2)

    o_ref[...] = out.astype(o_ref.dtype)


# ---------------------------------------------------------------------------
# Tiling plan
# ---------------------------------------------------------------------------
def _round_up(a, b):
    return -(-a // b) * b


def _plan_tiles(NC, H, W, Ho, Wo, itemsize):
    """Pick nc_tile from *padded* VMEM footprints ((8,128) tiling of the last
    two dims of every block) and return a matching vmem limit."""
    pad = lambda r, c: (_round_up(max(r, 1), 8) *
                        _round_up(max(c, 1), 128) * itemsize)
    in_s = pad(H, W)          # input slice, per N*C element
    tr_s = pad(W, Ho)         # transposed scratch slice
    out_s = pad(Ho, Wo)       # output slice
    per_slice = 2 * in_s + tr_s + 2 * out_s   # double-buffered in/out + scratch

    budget = 24 * 1024 * 1024                 # safe on v5e / v6e / v7x
    nc_tile = max(1, min(NC, budget // max(1, per_slice)))

    # Keep >= 2 grid steps for megacore sharding unless the problem is tiny.
    if NC >= 2 and NC * in_s > 2 * 1024 * 1024:
        nc_tile = min(nc_tile, -(-NC // 2))

    vmem_limit = int(max(32 * 1024 * 1024,
                         nc_tile * per_slice + 4 * 1024 * 1024))
    return nc_tile, vmem_limit


# ---------------------------------------------------------------------------
# Wrapper
# ---------------------------------------------------------------------------
def _build_pallas_fn(N, C, H, W, dtype, fast):
    Ho = (H - _K) // _K + 1
    Wo = (W - _K) // _K + 1
    NC = N * C
    nc_tile, vmem_limit = _plan_tiles(NC, H, W, Ho, Wo, dtype.itemsize)
    kernel = _maxpool3x3_fast_kernel if fast else _maxpool3x3_safe_kernel

    call = pl.pallas_call(
        kernel,
        out_shape=jax.ShapeDtypeStruct((NC, Ho, Wo), dtype),
        grid=(pl.cdiv(NC, nc_tile),),
        in_specs=[pl.BlockSpec((nc_tile, H, W), lambda i: (i, 0, 0))],
        out_specs=pl.BlockSpec((nc_tile, Ho, Wo), lambda i: (i, 0, 0)),
        scratch_shapes=[pltpu.VMEM((nc_tile, W, Ho), dtype)],
        compiler_params=pltpu.CompilerParams(
            dimension_semantics=("parallel",),
            vmem_limit_bytes=vmem_limit),
    )

    @jax.jit
    def fn(x):
        xr = x.reshape(NC, H, W)            # contiguous merge: no data movement
        out = call(xr)
        return out.reshape(N, C, Ho, Wo)    # contiguous split: no data movement

    return fn


_FN_CACHE = {}


def maxpool2d_k3(x):
    """MaxPool2d(kernel_size=3): x (N, C, H, W) -> (N, C, H//3, W//3)."""
    N, C, H, W = x.shape
    key = (N, C, H, W, str(x.dtype))
    fn = _FN_CACHE.get(key)
    if fn is not None:
        return fn(x)

    fast_fn = _build_pallas_fn(N, C, H, W, x.dtype, fast=True)
    try:
        out = jax.block_until_ready(fast_fn(x))
        _FN_CACHE[key] = fast_fn
        return out
    except Exception:
        # One-time compile guard: if this Mosaic build rejects the
        # strided-load / transpose path, use the validated slow kernel.
        safe_fn = _build_pallas_fn(N, C, H, W, x.dtype, fast=False)
        _FN_CACHE[key] = safe_fn
        return safe_fn(x)


class Layer1:
    """JAX mirror of the PyTorch `layer1` module (no parameters)."""

    def __call__(self, x):
        return maxpool2d_k3(x)


def _reference_maxpool2d_k3(x):
    # Independent reference via lax.reduce_window (VALID padding, stride 3).
    return jax.lax.reduce_window(
        x,
        -jnp.inf,
        jax.lax.max,
        window_dimensions=(1, 1, _K, _K),
        window_strides=(1, 1, _K, _K),
        padding="VALID",
    )


if __name__ == "__main__":
    key = jax.random.PRNGKey(0)
    # NCHW, same convention as the PyTorch module.
    x = jax.random.normal(key, (2, 4, 16, 16), dtype=jnp.float32)

    model = Layer1()
    y = jax.block_until_ready(model(x))

    y_ref = _reference_maxpool2d_k3(x)
    assert y.shape == (2, 4, 5, 5), y.shape
    assert jnp.allclose(y, y_ref), "Pallas maxpool mismatch vs reference"

    print("KERNEL_OK")
</pallas_src>

<mosaic_0001>
module attributes {stable_mosaic.version = 11 : i64} {
  func.func @_maxpool3x3_fast_kernel(%arg0: i32, %arg1: memref<8x16x16xf32, #tpu.memory_space<vmem>>, %arg2: memref<8x5x5xf32, #tpu.memory_space<vmem>>, %arg3: memref<8x16x5xf32, #tpu.memory_space<vmem>>) attributes {dimension_semantics = [#tpu.dimension_semantics<parallel>], iteration_bounds = array<i64: 1>, scalar_prefetch = 0 : i64, scratch_operands = 1 : i64, tpu.core_type = #tpu.core_type<tc>, window_params = [{transform_indices = @transform_0, window_bounds = array<i64: 8, 16, 16>}, {transform_indices = @transform_1, window_bounds = array<i64: 8, 5, 5>}]} {
    %c0 = arith.constant 0 : index
    %c0_0 = arith.constant 0 : index
    %c0_1 = arith.constant 0 : index
    %0 = tpu.strided_load %arg1[%c0, %c0_0, %c0_1] {strides = array<i32: 1, 3, 1>} : memref<8x16x16xf32, #tpu.memory_space<vmem>>, vector<8x5x16xf32>
    %c0_2 = arith.constant 0 : index
    %c1 = arith.constant 1 : index
    %c0_3 = arith.constant 0 : index
    %1 = tpu.strided_load %arg1[%c0_2, %c1, %c0_3] {strides = array<i32: 1, 3, 1>} : memref<8x16x16xf32, #tpu.memory_space<vmem>>, vector<8x5x16xf32>
    %c0_4 = arith.constant 0 : index
    %c2 = arith.constant 2 : index
    %c0_5 = arith.constant 0 : index
    %2 = tpu.strided_load %arg1[%c0_4, %c2, %c0_5] {strides = array<i32: 1, 3, 1>} : memref<8x16x16xf32, #tpu.memory_space<vmem>>, vector<8x5x16xf32>
    %3 = arith.maximumf %0, %1 : vector<8x5x16xf32>
    %4 = arith.maximumf %3, %2 : vector<8x5x16xf32>
    %5 = tpu.transpose %4, [0, 2, 1] : vector<8x5x16xf32> -> vector<8x16x5xf32>
    %c0_6 = arith.constant 0 : index
    %c0_7 = arith.constant 0 : index
    %c0_8 = arith.constant 0 : index
    %6 = vector.load %arg3[%c0_6, %c0_7, %c0_8] : memref<8x16x5xf32, #tpu.memory_space<vmem>>, vector<8x16x5xf32>
    tpu.vector_store %arg3[%c0_6, %c0_7, %c0_8], %5 {strides = array<i32>} : memref<8x16x5xf32, #tpu.memory_space<vmem>>, vector<8x16x5xf32>,
    %c0_9 = arith.constant 0 : index
    %c0_10 = arith.constant 0 : index
    %c0_11 = arith.constant 0 : index
    %7 = tpu.strided_load %arg3[%c0_9, %c0_10, %c0_11] {strides = array<i32: 1, 3, 1>} : memref<8x16x5xf32, #tpu.memory_space<vmem>>, vector<8x5x5xf32>
    %c0_12 = arith.constant 0 : index
    %c1_13 = arith.constant 1 : index
    %c0_14 = arith.constant 0 : index
    %8 = tpu.strided_load %arg3[%c0_12, %c1_13, %c0_14] {strides = array<i32: 1, 3, 1>} : memref<8x16x5xf32, #tpu.memory_space<vmem>>, vector<8x5x5xf32>
    %c0_15 = arith.constant 0 : index
    %c2_16 = arith.constant 2 : index
    %c0_17 = arith.constant 0 : index
    %9 = tpu.strided_load %arg3[%c0_15, %c2_16, %c0_17] {strides = array<i32: 1, 3, 1>} : memref<8x16x5xf32, #tpu.memory_space<vmem>>, vector<8x5x5xf32>
    %10 = arith.maximumf %7, %8 : vector<8x5x5xf32>
    %11 = arith.maximumf %10, %9 : vector<8x5x5xf32>
    %12 = tpu.transpose %11, [0, 2, 1] : vector<8x5x5xf32> -> vector<8x5x5xf32>
    %c0_18 = arith.constant 0 : index
    %c0_19 = arith.constant 0 : index
    %c0_20 = arith.constant 0 : index
    %13 = vector.load %arg2[%c0_18, %c0_19, %c0_20] : memref<8x5x5xf32, #tpu.memory_space<vmem>>, vector<8x5x5xf32>
    tpu.vector_store %arg2[%c0_18, %c0_19, %c0_20], %12 {strides = array<i32>} : memref<8x5x5xf32, #tpu.memory_space<vmem>>, vector<8x5x5xf32>,
    return
  }
  func.func @transform_0(%arg0: i32) -> (i32, i32, i32) {
    %c0_i32 = arith.constant 0 : i32
    %c0_i32_0 = arith.constant 0 : i32
    %c0_i32_1 = arith.constant 0 : i32
    return %arg0, %c0_i32, %c0_i32_0 : i32, i32, i32
  }
  func.func @transform_1(%arg0: i32) -> (i32, i32, i32) {
    %c0_i32 = arith.constant 0 : i32
    %c0_i32_0 = arith.constant 0 : i32
    %c0_i32_1 = arith.constant 0 : i32
    return %arg0, %c0_i32, %c0_i32_0 : i32, i32, i32
  }
}

module attributes {stable_mosaic.version = 11 : i64} {
  func.func @_maxpool3x3_safe_kernel(%arg0: i32, %arg1: memref<8x16x16xf32, #tpu.memory_space<vmem>>, %arg2: memref<8x5x5xf32, #tpu.memory_space<vmem>>, %arg3: memref<8x16x5xf32, #tpu.memory_space<vmem>>) attributes {dimension_semantics = [#tpu.dimension_semantics<parallel>], iteration_bounds = array<i64: 1>, scalar_prefetch = 0 : i64, scratch_operands = 1 : i64, tpu.core_type = #tpu.core_type<tc>, window_params = [{transform_indices = @transform_0, window_bounds = array<i64: 8, 16, 16>}, {transform_indices = @transform_1, window_bounds = array<i64: 8, 5, 5>}]} {
    %c0 = arith.constant 0 : index
    %c0_0 = arith.constant 0 : index
    %c0_1 = arith.constant 0 : index
    %0 = vector.load %arg1[%c0, %c0_0, %c0_1] : memref<8x16x16xf32, #tpu.memory_space<vmem>>, vector<8x16x16xf32>
    %1 = vector.extract_strided_slice %0 {offsets = [0, 0, 0], sizes = [8, 1, 16], strides = [1, 1, 1]} : vector<8x16x16xf32> to vector<8x1x16xf32>
    %2 = vector.extract_strided_slice %0 {offsets = [0, 1, 0], sizes = [8, 1, 16], strides = [1, 1, 1]} : vector<8x16x16xf32> to vector<8x1x16xf32>
    %3 = vector.extract_strided_slice %0 {offsets = [0, 2, 0], sizes = [8, 1, 16], strides = [1, 1, 1]} : vector<8x16x16xf32> to vector<8x1x16xf32>
    %4 = arith.maximumf %1, %2 : vector<8x1x16xf32>
    %5 = arith.maximumf %4, %3 : vector<8x1x16xf32>
    %6 = vector.extract_strided_slice %0 {offsets = [0, 3, 0], sizes = [8, 1, 16], strides = [1, 1, 1]} : vector<8x16x16xf32> to vector<8x1x16xf32>
    %7 = vector.extract_strided_slice %0 {offsets = [0, 4, 0], sizes = [8, 1, 16], strides = [1, 1, 1]} : vector<8x16x16xf32> to vector<8x1x16xf32>
    %8 = vector.extract_strided_slice %0 {offsets = [0, 5, 0], sizes = [8, 1, 16], strides = [1, 1, 1]} : vector<8x16x16xf32> to vector<8x1x16xf32>
    %9 = arith.maximumf %6, %7 : vector<8x1x16xf32>
    %10 = arith.maximumf %9, %8 : vector<8x1x16xf32>
    %11 = vector.extract_strided_slice %0 {offsets = [0, 6, 0], sizes = [8, 1, 16], strides = [1, 1, 1]} : vector<8x16x16xf32> to vector<8x1x16xf32>
    %12 = vector.extract_strided_slice %0 {offsets = [0, 7, 0], sizes = [8, 1, 16], strides = [1, 1, 1]} : vector<8x16x16xf32> to vector<8x1x16xf32>
    %13 = vector.extract_strided_slice %0 {offsets = [0, 8, 0], sizes = [8, 1, 16], strides = [1, 1, 1]} : vector<8x16x16xf32> to vector<8x1x16xf32>
    %14 = arith.maximumf %11, %12 : vector<8x1x16xf32>
    %15 = arith.maximumf %14, %13 : vector<8x1x16xf32>
    %16 = vector.extract_strided_slice %0 {offsets = [0, 9, 0], sizes = [8, 1, 16], strides = [1, 1, 1]} : vector<8x16x16xf32> to vector<8x1x16xf32>
    %17 = vector.extract_strided_slice %0 {offsets = [0, 10, 0], sizes = [8, 1, 16], strides = [1, 1, 1]} : vector<8x16x16xf32> to vector<8x1x16xf32>
    %18 = vector.extract_strided_slice %0 {offsets = [0, 11, 0], sizes = [8, 1, 16], strides = [1, 1, 1]} : vector<8x16x16xf32> to vector<8x1x16xf32>
    %19 = arith.maximumf %16, %17 : vector<8x1x16xf32>
    %20 = arith.maximumf %19, %18 : vector<8x1x16xf32>
    %21 = vector.extract_strided_slice %0 {offsets = [0, 12, 0], sizes = [8, 1, 16], strides = [1, 1, 1]} : vector<8x16x16xf32> to vector<8x1x16xf32>
    %22 = vector.extract_strided_slice %0 {offsets = [0, 13, 0], sizes = [8, 1, 16], strides = [1, 1, 1]} : vector<8x16x16xf32> to vector<8x1x16xf32>
    %23 = vector.extract_strided_slice %0 {offsets = [0, 14, 0], sizes = [8, 1, 16], strides = [1, 1, 1]} : vector<8x16x16xf32> to vector<8x1x16xf32>
    %24 = arith.maximumf %21, %22 : vector<8x1x16xf32>
    %25 = arith.maximumf %24, %23 : vector<8x1x16xf32>
    %26 = tpu.concatenate %5, %10, %15, %20, %25 in 1 : vector<8x1x16xf32>, vector<8x1x16xf32>, vector<8x1x16xf32>, vector<8x1x16xf32>, vector<8x1x16xf32> -> vector<8x5x16xf32>
    %27 = vector.extract_strided_slice %26 {offsets = [0, 0, 0], sizes = [8, 5, 1], strides = [1, 1, 1]} : vector<8x5x16xf32> to vector<8x5x1xf32>
    %28 = vector.extract_strided_slice %26 {offsets = [0, 0, 1], sizes = [8, 5, 1], strides = [1, 1, 1]} : vector<8x5x16xf32> to vector<8x5x1xf32>
    %29 = vector.extract_strided_slice %26 {offsets = [0, 0, 2], sizes = [8, 5, 1], strides = [1, 1, 1]} : vector<8x5x16xf32> to vector<8x5x1xf32>
    %30 = arith.maximumf %27, %28 : vector<8x5x1xf32>
    %31 = arith.maximumf %30, %29 : vector<8x5x1xf32>
    %32 = vector.extract_strided_slice %26 {offsets = [0, 0, 3], sizes = [8, 5, 1], strides = [1, 1, 1]} : vector<8x5x16xf32> to vector<8x5x1xf32>
    %33 = vector.extract_strided_slice %26 {offsets = [0, 0, 4], sizes = [8, 5, 1], strides = [1, 1, 1]} : vector<8x5x16xf32> to vector<8x5x1xf32>
    %34 = vector.extract_strided_slice %26 {offsets = [0, 0, 5], sizes = [8, 5, 1], strides = [1, 1, 1]} : vector<8x5x16xf32> to vector<8x5x1xf32>
    %35 = arith.maximumf %32, %33 : vector<8x5x1xf32>
    %36 = arith.maximumf %35, %34 : vector<8x5x1xf32>
    %37 = vector.extract_strided_slice %26 {offsets = [0, 0, 6], sizes = [8, 5, 1], strides = [1, 1, 1]} : vector<8x5x16xf32> to vector<8x5x1xf32>
    %38 = vector.extract_strided_slice %26 {offsets = [0, 0, 7], sizes = [8, 5, 1], strides = [1, 1, 1]} : vector<8x5x16xf32> to vector<8x5x1xf32>
    %39 = vector.extract_strided_slice %26 {offsets = [0, 0, 8], sizes = [8, 5, 1], strides = [1, 1, 1]} : vector<8x5x16xf32> to vector<8x5x1xf32>
    %40 = arith.maximumf %37, %38 : vector<8x5x1xf32>
    %41 = arith.maximumf %40, %39 : vector<8x5x1xf32>
    %42 = vector.extract_strided_slice %26 {offsets = [0, 0, 9], sizes = [8, 5, 1], strides = [1, 1, 1]} : vector<8x5x16xf32> to vector<8x5x1xf32>
    %43 = vector.extract_strided_slice %26 {offsets = [0, 0, 10], sizes = [8, 5, 1], strides = [1, 1, 1]} : vector<8x5x16xf32> to vector<8x5x1xf32>
    %44 = vector.extract_strided_slice %26 {offsets = [0, 0, 11], sizes = [8, 5, 1], strides = [1, 1, 1]} : vector<8x5x16xf32> to vector<8x5x1xf32>
    %45 = arith.maximumf %42, %43 : vector<8x5x1xf32>
    %46 = arith.maximumf %45, %44 : vector<8x5x1xf32>
    %47 = vector.extract_strided_slice %26 {offsets = [0, 0, 12], sizes = [8, 5, 1], strides = [1, 1, 1]} : vector<8x5x16xf32> to vector<8x5x1xf32>
    %48 = vector.extract_strided_slice %26 {offsets = [0, 0, 13], sizes = [8, 5, 1], strides = [1, 1, 1]} : vector<8x5x16xf32> to vector<8x5x1xf32>
    %49 = vector.extract_strided_slice %26 {offsets = [0, 0, 14], sizes = [8, 5, 1], strides = [1, 1, 1]} : vector<8x5x16xf32> to vector<8x5x1xf32>
    %50 = arith.maximumf %47, %48 : vector<8x5x1xf32>
    %51 = arith.maximumf %50, %49 : vector<8x5x1xf32>
    %52 = tpu.concatenate %31, %36, %41, %46, %51 in 2 : vector<8x5x1xf32>, vector<8x5x1xf32>, vector<8x5x1xf32>, vector<8x5x1xf32>, vector<8x5x1xf32> -> vector<8x5x5xf32>
    %c0_2 = arith.constant 0 : index
    %c0_3 = arith.constant 0 : index
    %c0_4 = arith.constant 0 : index
    %53 = vector.load %arg2[%c0_2, %c0_3, %c0_4] : memref<8x5x5xf32, #tpu.memory_space<vmem>>, vector<8x5x5xf32>
    tpu.vector_store %arg2[%c0_2, %c0_3, %c0_4], %52 {strides = array<i32>} : memref<8x5x5xf32, #tpu.memory_space<vmem>>, vector<8x5x5xf32>,
    return
  }
  func.func @transform_0(%arg0: i32) -> (i32, i32, i32) {
    %c0_i32 = arith.constant 0 : i32
    %c0_i32_0 = arith.constant 0 : i32
    %c0_i32_1 = arith.constant 0 : i32
    return %arg0, %c0_i32, %c0_i32_0 : i32, i32, i32
  }
  func.func @transform_1(%arg0: i32) -> (i32, i32, i32) {
    %c0_i32 = arith.constant 0 : i32
    %c0_i32_0 = arith.constant 0 : i32
    %c0_i32_1 = arith.constant 0 : i32
    return %arg0, %c0_i32, %c0_i32_0 : i32, i32, i32
  }
}

</mosaic_0001>

<llo_original>
// kernel: fn.1
$region0: #{fn.1}
  #allocation0 [shape = 'u32[]', space=smem, size = 0x4, offset = 0x4, fixed_abs, tag = 'smem constant byte address 0x4 - core index']
  #allocation1 [shape = 'u32[144,128]{1,0:T(1,128)}', space=vmem, size = 0x12000, scoped, tag = 'internal scratch']
  #allocation2 [shape = 'f32[8,16,5]{2,1,0:T(8,128)}', space=vmem, size = 0x10000, scoped, tag = 'scratch operand']
  %s0 = inlined_call_operand.hbm [shape: f32[8,16,16], index: 0, kind: input, shape index: {}]
  %s1 = inlined_call_operand.vmem [shape: f32[8,5,5], index: 1, kind: output, shape index: {}]
  %s2 = sld [smem:[#allocation0]]
  $region18: #{fn.1} parent=0
    _
  %s4 = ssub.s32 1, %s2
  %s5 = scalar_select 0, %s4, %s2
  $region1: #{fn.1} parent=0
    #allocation3 [shape = 'u8[65536]{0}', space=vmem, size = 0x10000, scoped, tag = 'input window, operand 0, single buffered']
    #allocation4 [shape = 's32[1]{0}', space=sflag, size = 0x4, scoped, tag = 'scoped memory for fn.1']
    %6 = vsyncpa [#allocation4], 0
    // Predicated region
    $region2: #{fn.1} parent=1 // pred_check
      _
    $region3: #{fn.1} parent=1 // pred_check_branch
      %8 = sbr.rel (0) target = $region5
    $region4: #{fn.1} parent=1 // pred_region
      %s10 = ssub.s32 2048, 2048
      %11 = vsyncadd [#allocation4], %s10
      %s12 = sshll.u32 [#allocation3], 4
      %s13 = int_to_ptr.vmem [resolvable:$true] %s12
      %18 = dma.hbm_to_vmem [thread:$0]  %s0, 2048, %s13, [#allocation4], 128, 128, 8
    $region5: #{fn.1} parent=1 // pred_fallthru
      _
    // Predicated region
    $region6: #{fn.1} parent=1 // pred_check
      _
    $region7: #{fn.1} parent=1 // pred_check_branch
      %20 = sbr.rel (0) target = $region9
    $region8: #{fn.1} parent=1 // pred_region
      %21 = dma.done [#allocation4], 2048
    $region9: #{fn.1} parent=1 // pred_fallthru
      _
    %v22 = vld [vmem:[#allocation3] ss:$3 sm:$0x1f]
    %s23 = scalar_lea.vmem [#allocation3], 16
    %v24 = vld [vmem:[%s23] ss:$3 sm:$0x1f]
    %s25 = scalar_lea.vmem [#allocation3], 32
    %v26 = vld [vmem:[%s25] ss:$3 sm:$0x1f]
    %s27 = scalar_lea.vmem [#allocation3], 48
    %v28 = vld [vmem:[%s27] ss:$3 sm:$0x1f]
    %s29 = scalar_lea.vmem [#allocation3], 64
    %v30 = vld [vmem:[%s29] ss:$3 sm:$0x1f]
    %s31 = scalar_lea.vmem [#allocation3], 80
    %v32 = vld [vmem:[%s31] ss:$3 sm:$0x1f]
    %s33 = scalar_lea.vmem [#allocation3], 96
    %v34 = vld [vmem:[%s33] ss:$3 sm:$0x1f]
    %s35 = scalar_lea.vmem [#allocation3], 112
    %v36 = vld [vmem:[%s35] ss:$3 sm:$0x1f]
    %s37 = scalar_lea.vmem [#allocation3], 1
    %v38 = vld [vmem:[%s37] ss:$3 sm:$0x1f]
    %s39 = scalar_lea.vmem [#allocation3], 17
    %v40 = vld [vmem:[%s39] ss:$3 sm:$0x1f]
    %s41 = scalar_lea.vmem [#allocation3], 33
    %v42 = vld [vmem:[%s41] ss:$3 sm:$0x1f]
    %s43 = scalar_lea.vmem [#allocation3], 49
    %v44 = vld [vmem:[%s43] ss:$3 sm:$0x1f]
    %s45 = scalar_lea.vmem [#allocation3], 65
    %v46 = vld [vmem:[%s45] ss:$3 sm:$0x1f]
    %s47 = scalar_lea.vmem [#allocation3], 81
    %v48 = vld [vmem:[%s47] ss:$3 sm:$0x1f]
    %s49 = scalar_lea.vmem [#allocation3], 97
    %v50 = vld [vmem:[%s49] ss:$3 sm:$0x1f]
    %s51 = scalar_lea.vmem [#allocation3], 113
    %v52 = vld [vmem:[%s51] ss:$3 sm:$0x1f]
    %s53 = scalar_lea.vmem [#allocation3], 2
    %v54 = vld [vmem:[%s53] ss:$3 sm:$0x1f]
    %s55 = scalar_lea.vmem [#allocation3], 18
    %v56 = vld [vmem:[%s55] ss:$3 sm:$0x1f]
    %s57 = scalar_lea.vmem [#allocation3], 34
    %v58 = vld [vmem:[%s57] ss:$3 sm:$0x1f]
    %s59 = scalar_lea.vmem [#allocation3], 50
    %v60 = vld [vmem:[%s59] ss:$3 sm:$0x1f]
    %s61 = scalar_lea.vmem [#allocation3], 66
    %v62 = vld [vmem:[%s61] ss:$3 sm:$0x1f]
    %s63 = scalar_lea.vmem [#allocation3], 82
    %v64 = vld [vmem:[%s63] ss:$3 sm:$0x1f]
    %s65 = scalar_lea.vmem [#allocation3], 98
    %v66 = vld [vmem:[%s65] ss:$3 sm:$0x1f]
    %s67 = scalar_lea.vmem [#allocation3], 114
    %v68 = vld [vmem:[%s67] ss:$3 sm:$0x1f]
    %v69 = vmax.f32 %v22, %v38
    %v70 = vmax.f32 %v24, %v40
    %v71 = vmax.f32 %v26, %v42
    %v72 = vmax.f32 %v28, %v44
    %v73 = vmax.f32 %v30, %v46
    %v74 = vmax.f32 %v32, %v48
    %v75 = vmax.f32 %v34, %v50
    %v76 = vmax.f32 %v36, %v52
    %v77 = vmax.f32 %v69, %v54
    %v78 = vmax.f32 %v70, %v56
    %v79 = vmax.f32 %v71, %v58
    %v80 = vmax.f32 %v72, %v60
    %v81 = vmax.f32 %v73, %v62
    %v82 = vmax.f32 %v74, %v64
    %v83 = vmax.f32 %v75, %v66
    %v84 = vmax.f32 %v76, %v68
    %85 = vxpose.xlu0.b32.start [1/16] %v77, 128
    %86 = vxpose.xlu0.b32.cont [2/16] 0.0, 128
    %87 = vxpose.xlu0.b32.cont [3/16] 0.0, 128
    %88 = vxpose.xlu0.b32.cont [4/16] 0.0, 128
    %89 = vxpose.xlu0.b32.cont [5/16] 0.0, 128
    %90 = vxpose.xlu0.b32.cont [6/16] 0.0, 128
    %91 = vxpose.xlu0.b32.cont [7/16] 0.0, 128
    %92 = vxpose.xlu0.b32.cont [8/16] 0.0, 128
    %93 = vxpose.xlu0.b32.cont [9/16] 0.0, 128
    %94 = vxpose.xlu0.b32.cont [10/16] 0.0, 128
    %95 = vxpose.xlu0.b32.cont [11/16] 0.0, 128
    %96 = vxpose.xlu0.b32.cont [12/16] 0.0, 128
    %97 = vxpose.xlu0.b32.cont [13/16] 0.0, 128
    %98 = vxpose.xlu0.b32.cont [14/16] 0.0, 128
    %99 = vxpose.xlu0.b32.cont [15/16] 0.0, 128
    %100 = vxpose.xlu0.b32.end [16/16] 0.0, 128
    %v101 = vpop.trf.xlu0
    %v102 = vpop.trf.xlu0
    %v103 = vpop.trf.xlu0
    %v104 = vpop.trf.xlu0
    %v105 = vpop.trf.xlu0
    %v106 = vpop.trf.xlu0
    %v107 = vpop.trf.xlu0
    %v108 = vpop.trf.xlu0
    %v109 = vpop.trf.xlu0
    %v110 = vpop.trf.xlu0
    %v111 = vpop.trf.xlu0
    %v112 = vpop.trf.xlu0
    %v113 = vpop.trf.xlu0
    %v114 = vpop.trf.xlu0
    %v115 = vpop.trf.xlu0
    %v116 = vpop.trf.xlu0
    %117 = vxpose.xlu0.b32.start [1/16] %v78, 128
    %118 = vxpose.xlu0.b32.cont [2/16] 0.0, 128
    %119 = vxpose.xlu0.b32.cont [3/16] 0.0, 128
    %120 = vxpose.xlu0.b32.cont [4/16] 0.0, 128
    %121 = vxpose.xlu0.b32.cont [5/16] 0.0, 128
    %122 = vxpose.xlu0.b32.cont [6/16] 0.0, 128
    %123 = vxpose.xlu0.b32.cont [7/16] 0.0, 128
    %124 = vxpose.xlu0.b32.cont [8/16] 0.0, 128
    %125 = vxpose.xlu0.b32.cont [9/16] 0.0, 128
    %126 = vxpose.xlu0.b32.cont [10/16] 0.0, 128
    %127 = vxpose.xlu0.b32.cont [11/16] 0.0, 128
    %128 = vxpose.xlu0.b32.cont [12/16] 0.0, 128
    %129 = vxpose.xlu0.b32.cont [13/16] 0.0, 128
    %130 = vxpose.xlu0.b32.cont [14/16] 0.0, 128
    %131 = vxpose.xlu0.b32.cont [15/16] 0.0, 128
    %132 = vxpose.xlu0.b32.end [16/16] 0.0, 128
    %v133 = vpop.trf.xlu0
    %v134 = vpop.trf.xlu0
    %v135 = vpop.trf.xlu0
    %v136 = vpop.trf.xlu0
    %v137 = vpop.trf.xlu0
    %v138 = vpop.trf.xlu0
    %v139 = vpop.trf.xlu0
    %v140 = vpop.trf.xlu0
    %v141 = vpop.trf.xlu0
    %v142 = vpop.trf.xlu0
    %v143 = vpop.trf.xlu0
    %v144 = vpop.trf.xlu0
    %v145 = vpop.trf.xlu0
    %v146 = vpop.trf.xlu0
    %v147 = vpop.trf.xlu0
    %v148 = vpop.trf.xlu0
    %149 = vxpose.xlu0.b32.start [1/16] %v79, 128
    %150 = vxpose.xlu0.b32.cont [2/16] 0.0, 128
    %151 = vxpose.xlu0.b32.cont [3/16] 0.0, 128
    %152 = vxpose.xlu0.b32.cont [4/16] 0.0, 128
    %153 = vxpose.xlu0.b32.cont [5/16] 0.0, 128
    %154 = vxpose.xlu0.b32.cont [6/16] 0.0, 128
    %155 = vxpose.xlu0.b32.cont [7/16] 0.0, 128
    %156 = vxpose.xlu0.b32.cont [8/16] 0.0, 128
    %157 = vxpose.xlu0.b32.cont [9/16] 0.0, 128
    %158 = vxpose.xlu0.b32.cont [10/16] 0.0, 128
    %159 = vxpose.xlu0.b32.cont [11/16] 0.0, 128
    %160 = vxpose.xlu0.b32.cont [12/16] 0.0, 128
    %161 = vxpose.xlu0.b32.cont [13/16] 0.0, 128
    %162 = vxpose.xlu0.b32.cont [14/16] 0.0, 128
    %163 = vxpose.xlu0.b32.cont [15/16] 0.0, 128
    %164 = vxpose.xlu0.b32.end [16/16] 0.0, 128
    %v165 = vpop.trf.xlu0
    %v166 = vpop.trf.xlu0
    %v167 = vpop.trf.xlu0
    %v168 = vpop.trf.xlu0
    %v169 = vpop.trf.xlu0
    %v170 = vpop.trf.xlu0
    %v171 = vpop.trf.xlu0
    %v172 = vpop.trf.xlu0
    %v173 = vpop.trf.xlu0
    %v174 = vpop.trf.xlu0
    %v175 = vpop.trf.xlu0
    %v176 = vpop.trf.xlu0
    %v177 = vpop.trf.xlu0
    %v178 = vpop.trf.xlu0
    %v179 = vpop.trf.xlu0
    %v180 = vpop.trf.xlu0
    %181 = vxpose.xlu0.b32.start [1/16] %v80, 128
    %182 = vxpose.xlu0.b32.cont [2/16] 0.0, 128
    %183 = vxpose.xlu0.b32.cont [3/16] 0.0, 128
    %184 = vxpose.xlu0.b32.cont [4/16] 0.0, 128
    %185 = vxpose.xlu0.b32.cont [5/16] 0.0, 128
    %186 = vxpose.xlu0.b32.cont [6/16] 0.0, 128
    %187 = vxpose.xlu0.b32.cont [7/16] 0.0, 128
    %188 = vxpose.xlu0.b32.cont [8/16] 0.0, 128
    %189 = vxpose.xlu0.b32.cont [9/16] 0.0, 128
    %190 = vxpose.xlu0.b32.cont [10/16] 0.0, 128
    %191 = vxpose.xlu0.b32.cont [11/16] 0.0, 128
    %192 = vxpose.xlu0.b32.cont [12/16] 0.0, 128
    %193 = vxpose.xlu0.b32.cont [13/16] 0.0, 128
    %194 = vxpose.xlu0.b32.cont [14/16] 0.0, 128
    %195 = vxpose.xlu0.b32.cont [15/16] 0.0, 128
    %196 = vxpose.xlu0.b32.end [16/16] 0.0, 128
    %v197 = vpop.trf.xlu0
    %v198 = vpop.trf.xlu0
    %v199 = vpop.trf.xlu0
    %v200 = vpop.trf.xlu0
    %v201 = vpop.trf.xlu0
    %v202 = vpop.trf.xlu0
    %v203 = vpop.trf.xlu0
    %v204 = vpop.trf.xlu0
    %v205 = vpop.trf.xlu0
    %v206 = vpop.trf.xlu0
    %v207 = vpop.trf.xlu0
    %v208 = vpop.trf.xlu0
    %v209 = vpop.trf.xlu0
    %v210 = vpop.trf.xlu0
    %v211 = vpop.trf.xlu0
    %v212 = vpop.trf.xlu0
    %213 = vxpose.xlu0.b32.start [1/16] %v81, 128
    %214 = vxpose.xlu0.b32.cont [2/16] 0.0, 128
    %215 = vxpose.xlu0.b32.cont [3/16] 0.0, 128
    %216 = vxpose.xlu0.b32.cont [4/16] 0.0, 128
    %217 = vxpose.xlu0.b32.cont [5/16] 0.0, 128
    %218 = vxpose.xlu0.b32.cont [6/16] 0.0, 128
    %219 = vxpose.xlu0.b32.cont [7/16] 0.0, 128
    %220 = vxpose.xlu0.b32.cont [8/16] 0.0, 128
    %221 = vxpose.xlu0.b32.cont [9/16] 0.0, 128
    %222 = vxpose.xlu0.b32.cont [10/16] 0.0, 128
    %223 = vxpose.xlu0.b32.cont [11/16] 0.0, 128
    %224 = vxpose.xlu0.b32.cont [12/16] 0.0, 128
    %225 = vxpose.xlu0.b32.cont [13/16] 0.0, 128
    %226 = vxpose.xlu0.b32.cont [14/16] 0.0, 128
    %227 = vxpose.xlu0.b32.cont [15/16] 0.0, 128
    %228 = vxpose.xlu0.b32.end [16/16] 0.0, 128
    %v229 = vpop.trf.xlu0
    %v230 = vpop.trf.xlu0
    %v231 = vpop.trf.xlu0
    %v232 = vpop.trf.xlu0
    %v233 = vpop.trf.xlu0
    %v234 = vpop.trf.xlu0
    %v235 = vpop.trf.xlu0
    %v236 = vpop.trf.xlu0
    %v237 = vpop.trf.xlu0
    %v238 = vpop.trf.xlu0
    %v239 = vpop.trf.xlu0
    %v240 = vpop.trf.xlu0
    %v241 = vpop.trf.xlu0
    %v242 = vpop.trf.xlu0
    %v243 = vpop.trf.xlu0
    %v244 = vpop.trf.xlu0
    %245 = vxpose.xlu0.b32.start [1/16] %v82, 128
    %246 = vxpose.xlu0.b32.cont [2/16] 0.0, 128
    %247 = vxpose.xlu0.b32.cont [3/16] 0.0, 128
    %248 = vxpose.xlu0.b32.cont [4/16] 0.0, 128
    %249 = vxpose.xlu0.b32.cont [5/16] 0.0, 128
    %250 = vxpose.xlu0.b32.cont [6/16] 0.0, 128
    %251 = vxpose.xlu0.b32.cont [7/16] 0.0, 128
    %252 = vxpose.xlu0.b32.cont [8/16] 0.0, 128
    %253 = vxpose.xlu0.b32.cont [9/16] 0.0, 128
    %254 = vxpose.xlu0.b32.cont [10/16] 0.0, 128
    %255 = vxpose.xlu0.b32.cont [11/16] 0.0, 128
    %256 = vxpose.xlu0.b32.cont [12/16] 0.0, 128
    %257 = vxpose.xlu0.b32.cont [13/16] 0.0, 128
    %258 = vxpose.xlu0.b32.cont [14/16] 0.0, 128
    %259 = vxpose.xlu0.b32.cont [15/16] 0.0, 128
    %260 = vxpose.xlu0.b32.end [16/16] 0.0, 128
    %v261 = vpop.trf.xlu0
    %v262 = vpop.trf.xlu0
    %v263 = vpop.trf.xlu0
    %v264 = vpop.trf.xlu0
    %v265 = vpop.trf.xlu0
    %v266 = vpop.trf.xlu0
    %v267 = vpop.trf.xlu0
    %v268 = vpop.trf.xlu0
    %v269 = vpop.trf.xlu0
    %v270 = vpop.trf.xlu0
    %v271 = vpop.trf.xlu0
    %v272 = vpop.trf.xlu0
    %v273 = vpop.trf.xlu0
    %v274 = vpop.trf.xlu0
    %v275 = vpop.trf.xlu0
    %v276 = vpop.trf.xlu0
    %277 = vxpose.xlu0.b32.start [1/16] %v83, 128
    %278 = vxpose.xlu0.b32.cont [2/16] 0.0, 128
    %279 = vxpose.xlu0.b32.cont [3/16] 0.0, 128
    %280 = vxpose.xlu0.b32.cont [4/16] 0.0, 128
    %281 = vxpose.xlu0.b32.cont [5/16] 0.0, 128
    %282 = vxpose.xlu0.b32.cont [6/16] 0.0, 128
    %283 = vxpose.xlu0.b32.cont [7/16] 0.0, 128
    %284 = vxpose.xlu0.b32.cont [8/16] 0.0, 128
    %285 = vxpose.xlu0.b32.cont [9/16] 0.0, 128
    %286 = vxpose.xlu0.b32.cont [10/16] 0.0, 128
    %287 = vxpose.xlu0.b32.cont [11/16] 0.0, 128
    %288 = vxpose.xlu0.b32.cont [12/16] 0.0, 128
    %289 = vxpose.xlu0.b32.cont [13/16] 0.0, 128
    %290 = vxpose.xlu0.b32.cont [14/16] 0.0, 128
    %291 = vxpose.xlu0.b32.cont [15/16] 0.0, 128
    %292 = vxpose.xlu0.b32.end [16/16] 0.0, 128
    %v293 = vpop.trf.xlu0
    %v294 = vpop.trf.xlu0
    %v295 = vpop.trf.xlu0
    %v296 = vpop.trf.xlu0
    %v297 = vpop.trf.xlu0
    %v298 = vpop.trf.xlu0
    %v299 = vpop.trf.xlu0
    %v300 = vpop.trf.xlu0
    %v301 = vpop.trf.xlu0
    %v302 = vpop.trf.xlu0
    %v303 = vpop.trf.xlu0
    %v304 = vpop.trf.xlu0
    %v305 = vpop.trf.xlu0
    %v306 = vpop.trf.xlu0
    %v307 = vpop.trf.xlu0
    %v308 = vpop.trf.xlu0
    %309 = vxpose.xlu0.b32.start [1/16] %v84, 128
    %310 = vxpose.xlu0.b32.cont [2/16] 0.0, 128
    %311 = vxpose.xlu0.b32.cont [3/16] 0.0, 128
    %312 = vxpose.xlu0.b32.cont [4/16] 0.0, 128
    %313 = vxpose.xlu0.b32.cont [5/16] 0.0, 128
    %314 = vxpose.xlu0.b32.cont [6/16] 0.0, 128
    %315 = vxpose.xlu0.b32.cont [7/16] 0.0, 128
    %316 = vxpose.xlu0.b32.cont [8/16] 0.0, 128
    %317 = vxpose.xlu0.b32.cont [9/16] 0.0, 128
    %318 = vxpose.xlu0.b32.cont [10/16] 0.0, 128
    %319 = vxpose.xlu0.b32.cont [11/16] 0.0, 128
    %320 = vxpose.xlu0.b32.cont [12/16] 0.0, 128
    %321 = vxpose.xlu0.b32.cont [13/16] 0.0, 128
    %322 = vxpose.xlu0.b32.cont [14/16] 0.0, 128
    %323 = vxpose.xlu0.b32.cont [15/16] 0.0, 128
    %324 = vxpose.xlu0.b32.end [16/16] 0.0, 128
    %v325 = vpop.trf.xlu0
    %v326 = vpop.trf.xlu0
    %v327 = vpop.trf.xlu0
    %v328 = vpop.trf.xlu0
    %v329 = vpop.trf.xlu0
    %v330 = vpop.trf.xlu0
    %v331 = vpop.trf.xlu0
    %v332 = vpop.trf.xlu0
    %v333 = vpop.trf.xlu0
    %v334 = vpop.trf.xlu0
    %v335 = vpop.trf.xlu0
    %v336 = vpop.trf.xlu0
    %v337 = vpop.trf.xlu0
    %v338 = vpop.trf.xlu0
    %v339 = vpop.trf.xlu0
    %v340 = vpop.trf.xlu0
    %vm341 = vcmask 39936
    %342 = vst.msk [vmem:[#allocation2] sm:$0xff] %vm341, %v101
    %343 = vst.msk [vmem:[#allocation2 + $0x8] sm:$0xff] %vm341, %v102
    %344 = vst.msk [vmem:[#allocation2 + $0x10] sm:$0xff] %vm341, %v133
    %345 = vst.msk [vmem:[#allocation2 + $0x18] sm:$0xff] %vm341, %v134
    %346 = vst.msk [vmem:[#allocation2 + $0x20] sm:$0xff] %vm341, %v165
    %347 = vst.msk [vmem:[#allocation2 + $0x28] sm:$0xff] %vm341, %v166
    %348 = vst.msk [vmem:[#allocation2 + $0x30] sm:$0xff] %vm341, %v197
    %349 = vst.msk [vmem:[#allocation2 + $0x38] sm:$0xff] %vm341, %v198
    %350 = vst.msk [vmem:[#allocation2 + $0x40] sm:$0xff] %vm341, %v229
    %351 = vst.msk [vmem:[#allocation2 + $0x48] sm:$0xff] %vm341, %v230
    %352 = vst.msk [vmem:[#allocation2 + $0x50] sm:$0xff] %vm341, %v261
    %353 = vst.msk [vmem:[#allocation2 + $0x58] sm:$0xff] %vm341, %v262
    %354 = vst.msk [vmem:[#allocation2 + $0x60] sm:$0xff] %vm341, %v293
    %355 = vst.msk [vmem:[#allocation2 + $0x68] sm:$0xff] %vm341, %v294
    %356 = vst.msk [vmem:[#allocation2 + $0x70] sm:$0xff] %vm341, %v325
    %357 = vst.msk [vmem:[#allocation2 + $0x78] sm:$0xff] %vm341, %v326
    %v358 = vld [vmem:[#allocation2] ss:$3 sm:$0x1f]
    %s359 = scalar_lea.vmem [#allocation2], 16
    %v360 = vld [vmem:[%s359] ss:$3 sm:$0x1f]
    %s361 = scalar_lea.vmem [#allocation2], 32
    %v362 = vld [vmem:[%s361] ss:$3 sm:$0x1f]
    %s363 = scalar_lea.vmem [#allocation2], 48
    %v364 = vld [vmem:[%s363] ss:$3 sm:$0x1f]
    %s365 = scalar_lea.vmem [#allocation2], 64
    %v366 = vld [vmem:[%s365] ss:$3 sm:$0x1f]
    %s367 = scalar_lea.vmem [#allocation2], 80
    %v368 = vld [vmem:[%s367] ss:$3 sm:$0x1f]
    %s369 = scalar_lea.vmem [#allocation2], 96
    %v370 = vld [vmem:[%s369] ss:$3 sm:$0x1f]
    %s371 = scalar_lea.vmem [#allocation2], 112
    %v372 = vld [vmem:[%s371] ss:$3 sm:$0x1f]
    %s373 = scalar_lea.vmem [#allocation2], 1
    %v374 = vld [vmem:[%s373] ss:$3 sm:$0x1f]
    %s375 = scalar_lea.vmem [#allocation2], 17
    %v376 = vld [vmem:[%s375] ss:$3 sm:$0x1f]
    %s377 = scalar_lea.vmem [#allocation2], 33
    %v378 = vld [vmem:[%s377] ss:$3 sm:$0x1f]
    %s379 = scalar_lea.vmem [#allocation2], 49
    %v380 = vld [vmem:[%s379] ss:$3 sm:$0x1f]
    %s381 = scalar_lea.vmem [#allocation2], 65
    %v382 = vld [vmem:[%s381] ss:$3 sm:$0x1f]
    %s383 = scalar_lea.vmem [#allocation2], 81
    %v384 = vld [vmem:[%s383] ss:$3 sm:$0x1f]
    %s385 = scalar_lea.vmem [#allocation2], 97
    %v386 = vld [vmem:[%s385] ss:$3 sm:$0x1f]
    %s387 = scalar_lea.vmem [#allocation2], 113
    %v388 = vld [vmem:[%s387] ss:$3 sm:$0x1f]
    %s389 = scalar_lea.vmem [#allocation2], 2
    %v390 = vld [vmem:[%s389] ss:$3 sm:$0x1f]
    %s391 = scalar_lea.vmem [#allocation2], 18
    %v392 = vld [vmem:[%s391] ss:$3 sm:$0x1f]
    %s393 = scalar_lea.vmem [#allocation2], 34
    %v394 = vld [vmem:[%s393] ss:$3 sm:$0x1f]
    %s395 = scalar_lea.vmem [#allocation2], 50
    %v396 = vld [vmem:[%s395] ss:$3 sm:$0x1f]
    %s397 = scalar_lea.vmem [#allocation2], 66
    %v398 = vld [vmem:[%s397] ss:$3 sm:$0x1f]
    %s399 = scalar_lea.vmem [#allocation2], 82
    %v400 = vld [vmem:[%s399] ss:$3 sm:$0x1f]
    %s401 = scalar_lea.vmem [#allocation2], 98
    %v402 = vld [vmem:[%s401] ss:$3 sm:$0x1f]
    %s403 = scalar_lea.vmem [#allocation2], 114
    %v404 = vld [vmem:[%s403] ss:$3 sm:$0x1f]
    %v405 = vmax.f32 %v358, %v374
    %v406 = vmax.f32 %v360, %v376
    %v407 = vmax.f32 %v362, %v378
    %v408 = vmax.f32 %v364, %v380
    %v409 = vmax.f32 %v366, %v382
    %v410 = vmax.f32 %v368, %v384
    %v411 = vmax.f32 %v370, %v386
    %v412 = vmax.f32 %v372, %v388
    %v413 = vmax.f32 %v405, %v390
    %v414 = vmax.f32 %v406, %v392
    %v415 = vmax.f32 %v407, %v394
    %v416 = vmax.f32 %v408, %v396
    %v417 = vmax.f32 %v409, %v398
    %v418 = vmax.f32 %v410, %v400
    %v419 = vmax.f32 %v411, %v402
    %v420 = vmax.f32 %v412, %v404
    %421 = vxpose.xlu0.b32.start [1/16] %v413, 128
    %422 = vxpose.xlu0.b32.cont [2/16] 0.0, 128
    %423 = vxpose.xlu0.b32.cont [3/16] 0.0, 128
    %424 = vxpose.xlu0.b32.cont [4/16] 0.0, 128
    %425 = vxpose.xlu0.b32.cont [5/16] 0.0, 128
    %426 = vxpose.xlu0.b32.cont [6/16] 0.0, 128
    %427 = vxpose.xlu0.b32.cont [7/16] 0.0, 128
    %428 = vxpose.xlu0.b32.cont [8/16] 0.0, 128
    %429 = vxpose.xlu0.b32.cont [9/16] 0.0, 128
    %430 = vxpose.xlu0.b32.cont [10/16] 0.0, 128
    %431 = vxpose.xlu0.b32.cont [11/16] 0.0, 128
    %432 = vxpose.xlu0.b32.cont [12/16] 0.0, 128
    %433 = vxpose.xlu0.b32.cont [13/16] 0.0, 128
    %434 = vxpose.xlu0.b32.cont [14/16] 0.0, 128
    %435 = vxpose.xlu0.b32.cont [15/16] 0.0, 128
    %436 = vxpose.xlu0.b32.end [16/16] 0.0, 128
    %v437 = vpop.trf.xlu0
    %v438 = vpop.trf.xlu0
    %v439 = vpop.trf.xlu0
    %v440 = vpop.trf.xlu0
    %v441 = vpop.trf.xlu0
    %v442 = vpop.trf.xlu0
    %v443 = vpop.trf.xlu0
    %v444 = vpop.trf.xlu0
    %v445 = vpop.trf.xlu0
    %v446 = vpop.trf.xlu0
    %v447 = vpop.trf.xlu0
    %v448 = vpop.trf.xlu0
    %v449 = vpop.trf.xlu0
    %v450 = vpop.trf.xlu0
    %v451 = vpop.trf.xlu0
    %v452 = vpop.trf.xlu0
    %453 = vxpose.xlu0.b32.start [1/16] %v414, 128
    %454 = vxpose.xlu0.b32.cont [2/16] 0.0, 128
    %455 = vxpose.xlu0.b32.cont [3/16] 0.0, 128
    %456 = vxpose.xlu0.b32.cont [4/16] 0.0, 128
    %457 = vxpose.xlu0.b32.cont [5/16] 0.0, 128
    %458 = vxpose.xlu0.b32.cont [6/16] 0.0, 128
    %459 = vxpose.xlu0.b32.cont [7/16] 0.0, 128
    %460 = vxpose.xlu0.b32.cont [8/16] 0.0, 128
    %461 = vxpose.xlu0.b32.cont [9/16] 0.0, 128
    %462 = vxpose.xlu0.b32.cont [10/16] 0.0, 128
    %463 = vxpose.xlu0.b32.cont [11/16] 0.0, 128
    %464 = vxpose.xlu0.b32.cont [12/16] 0.0, 128
    %465 = vxpose.xlu0.b32.cont [13/16] 0.0, 128
    %466 = vxpose.xlu0.b32.cont [14/16] 0.0, 128
    %467 = vxpose.xlu0.b32.cont [15/16] 0.0, 128
    %468 = vxpose.xlu0.b32.end [16/16] 0.0, 128
    %v469 = vpop.trf.xlu0
    %v470 = vpop.trf.xlu0
    %v471 = vpop.trf.xlu0
    %v472 = vpop.trf.xlu0
    %v473 = vpop.trf.xlu0
    %v474 = vpop.trf.xlu0
    %v475 = vpop.trf.xlu0
    %v476 = vpop.trf.xlu0
    %v477 = vpop.trf.xlu0
    %v478 = vpop.trf.xlu0
    %v479 = vpop.trf.xlu0
    %v480 = vpop.trf.xlu0
    %v481 = vpop.trf.xlu0
    %v482 = vpop.trf.xlu0
    %v483 = vpop.trf.xlu0
    %v484 = vpop.trf.xlu0
    %485 = vxpose.xlu0.b32.start [1/16] %v415, 128
    %486 = vxpose.xlu0.b32.cont [2/16] 0.0, 128
    %487 = vxpose.xlu0.b32.cont [3/16] 0.0, 128
    %488 = vxpose.xlu0.b32.cont [4/16] 0.0, 128
    %489 = vxpose.xlu0.b32.cont [5/16] 0.0, 128
    %490 = vxpose.xlu0.b32.cont [6/16] 0.0, 128
    %491 = vxpose.xlu0.b32.cont [7/16] 0.0, 128
    %492 = vxpose.xlu0.b32.cont [8/16] 0.0, 128
    %493 = vxpose.xlu0.b32.cont [9/16] 0.0, 128
    %494 = vxpose.xlu0.b32.cont [10/16] 0.0, 128
    %495 = vxpose.xlu0.b32.cont [11/16] 0.0, 128
    %496 = vxpose.xlu0.b32.cont [12/16] 0.0, 128
    %497 = vxpose.xlu0.b32.cont [13/16] 0.0, 128
    %498 = vxpose.xlu0.b32.cont [14/16] 0.0, 128
    %499 = vxpose.xlu0.b32.cont [15/16] 0.0, 128
    %500 = vxpose.xlu0.b32.end [16/16] 0.0, 128
    %v501 = vpop.trf.xlu0
    %v502 = vpop.trf.xlu0
    %v503 = vpop.trf.xlu0
    %v504 = vpop.trf.xlu0
    %v505 = vpop.trf.xlu0
    %v506 = vpop.trf.xlu0
    %v507 = vpop.trf.xlu0
    %v508 = vpop.trf.xlu0
    %v509 = vpop.trf.xlu0
    %v510 = vpop.trf.xlu0
    %v511 = vpop.trf.xlu0
    %v512 = vpop.trf.xlu0
    %v513 = vpop.trf.xlu0
    %v514 = vpop.trf.xlu0
    %v515 = vpop.trf.xlu0
    %v516 = vpop.trf.xlu0
    %517 = vxpose.xlu0.b32.start [1/16] %v416, 128
    %518 = vxpose.xlu0.b32.cont [2/16] 0.0, 128
    %519 = vxpose.xlu0.b32.cont [3/16] 0.0, 128
    %520 = vxpose.xlu0.b32.cont [4/16] 0.0, 128
    %521 = vxpose.xlu0.b32.cont [5/16] 0.0, 128
    %522 = vxpose.xlu0.b32.cont [6/16] 0.0, 128
    %523 = vxpose.xlu0.b32.cont [7/16] 0.0, 128
    %524 = vxpose.xlu0.b32.cont [8/16] 0.0, 128
    %525 = vxpose.xlu0.b32.cont [9/16] 0.0, 128
    %526 = vxpose.xlu0.b32.cont [10/16] 0.0, 128
    %527 = vxpose.xlu0.b32.cont [11/16] 0.0, 128
    %528 = vxpose.xlu0.b32.cont [12/16] 0.0, 128
    %529 = vxpose.xlu0.b32.cont [13/16] 0.0, 128
    %530 = vxpose.xlu0.b32.cont [14/16] 0.0, 128
    %531 = vxpose.xlu0.b32.cont [15/16] 0.0, 128
    %532 = vxpose.xlu0.b32.end [16/16] 0.0, 128
    %v533 = vpop.trf.xlu0
    %v534 = vpop.trf.xlu0
    %v535 = vpop.trf.xlu0
    %v536 = vpop.trf.xlu0
    %v537 = vpop.trf.xlu0
    %v538 = vpop.trf.xlu0
    %v539 = vpop.trf.xlu0
    %v540 = vpop.trf.xlu0
    %v541 = vpop.trf.xlu0
    %v542 = vpop.trf.xlu0
    %v543 = vpop.trf.xlu0
    %v544 = vpop.trf.xlu0
    %v545 = vpop.trf.xlu0
    %v546 = vpop.trf.xlu0
    %v547 = vpop.trf.xlu0
    %v548 = vpop.trf.xlu0
    %549 = vxpose.xlu0.b32.start [1/16] %v417, 128
    %550 = vxpose.xlu0.b32.cont [2/16] 0.0, 128
    %551 = vxpose.xlu0.b32.cont [3/16] 0.0, 128
    %552 = vxpose.xlu0.b32.cont [4/16] 0.0, 128
    %553 = vxpose.xlu0.b32.cont [5/16] 0.0, 128
    %554 = vxpose.xlu0.b32.cont [6/16] 0.0, 128
    %555 = vxpose.xlu0.b32.cont [7/16] 0.0, 128
    %556 = vxpose.xlu0.b32.cont [8/16] 0.0, 128
    %557 = vxpose.xlu0.b32.cont [9/16] 0.0, 128
    %558 = vxpose.xlu0.b32.cont [10/16] 0.0, 128
    %559 = vxpose.xlu0.b32.cont [11/16] 0.0, 128
    %560 = vxpose.xlu0.b32.cont [12/16] 0.0, 128
    %561 = vxpose.xlu0.b32.cont [13/16] 0.0, 128
    %562 = vxpose.xlu0.b32.cont [14/16] 0.0, 128
    %563 = vxpose.xlu0.b32.cont [15/16] 0.0, 128
    %564 = vxpose.xlu0.b32.end [16/16] 0.0, 128
    %v565 = vpop.trf.xlu0
    %v566 = vpop.trf.xlu0
    %v567 = vpop.trf.xlu0
    %v568 = vpop.trf.xlu0
    %v569 = vpop.trf.xlu0
    %v570 = vpop.trf.xlu0
    %v571 = vpop.trf.xlu0
    %v572 = vpop.trf.xlu0
    %v573 = vpop.trf.xlu0
    %v574 = vpop.trf.xlu0
    %v575 = vpop.trf.xlu0
    %v576 = vpop.trf.xlu0
    %v577 = vpop.trf.xlu0
    %v578 = vpop.trf.xlu0
    %v579 = vpop.trf.xlu0
    %v580 = vpop.trf.xlu0
    %581 = vxpose.xlu0.b32.start [1/16] %v418, 128
    %582 = vxpose.xlu0.b32.cont [2/16] 0.0, 128
    %583 = vxpose.xlu0.b32.cont [3/16] 0.0, 128
    %584 = vxpose.xlu0.b32.cont [4/16] 0.0, 128
    %585 = vxpose.xlu0.b32.cont [5/16] 0.0, 128
    %586 = vxpose.xlu0.b32.cont [6/16] 0.0, 128
    %587 = vxpose.xlu0.b32.cont [7/16] 0.0, 128
    %588 = vxpose.xlu0.b32.cont [8/16] 0.0, 128
    %589 = vxpose.xlu0.b32.cont [9/16] 0.0, 128
    %590 = vxpose.xlu0.b32.cont [10/16] 0.0, 128
    %591 = vxpose.xlu0.b32.cont [11/16] 0.0, 128
    %592 = vxpose.xlu0.b32.cont [12/16] 0.0, 128
    %593 = vxpose.xlu0.b32.cont [13/16] 0.0, 128
    %594 = vxpose.xlu0.b32.cont [14/16] 0.0, 128
    %595 = vxpose.xlu0.b32.cont [15/16] 0.0, 128
    %596 = vxpose.xlu0.b32.end [16/16] 0.0, 128
    %v597 = vpop.trf.xlu0
    %v598 = vpop.trf.xlu0
    %v599 = vpop.trf.xlu0
    %v600 = vpop.trf.xlu0
    %v601 = vpop.trf.xlu0
    %v602 = vpop.trf.xlu0
    %v603 = vpop.trf.xlu0
    %v604 = vpop.trf.xlu0
    %v605 = vpop.trf.xlu0
    %v606 = vpop.trf.xlu0
    %v607 = vpop.trf.xlu0
    %v608 = vpop.trf.xlu0
    %v609 = vpop.trf.xlu0
    %v610 = vpop.trf.xlu0
    %v611 = vpop.trf.xlu0
    %v612 = vpop.trf.xlu0
    %613 = vxpose.xlu0.b32.start [1/16] %v419, 128
    %614 = vxpose.xlu0.b32.cont [2/16] 0.0, 128
    %615 = vxpose.xlu0.b32.cont [3/16] 0.0, 128
    %616 = vxpose.xlu0.b32.cont [4/16] 0.0, 128
    %617 = vxpose.xlu0.b32.cont [5/16] 0.0, 128
    %618 = vxpose.xlu0.b32.cont [6/16] 0.0, 128
    %619 = vxpose.xlu0.b32.cont [7/16] 0.0, 128
    %620 = vxpose.xlu0.b32.cont [8/16] 0.0, 128
    %621 = vxpose.xlu0.b32.cont [9/16] 0.0, 128
    %622 = vxpose.xlu0.b32.cont [10/16] 0.0, 128
    %623 = vxpose.xlu0.b32.cont [11/16] 0.0, 128
    %624 = vxpose.xlu0.b32.cont [12/16] 0.0, 128
    %625 = vxpose.xlu0.b32.cont [13/16] 0.0, 128
    %626 = vxpose.xlu0.b32.cont [14/16] 0.0, 128
    %627 = vxpose.xlu0.b32.cont [15/16] 0.0, 128
    %628 = vxpose.xlu0.b32.end [16/16] 0.0, 128
    %v629 = vpop.trf.xlu0
    %v630 = vpop.trf.xlu0
    %v631 = vpop.trf.xlu0
    %v632 = vpop.trf.xlu0
    %v633 = vpop.trf.xlu0
    %v634 = vpop.trf.xlu0
    %v635 = vpop.trf.xlu0
    %v636 = vpop.trf.xlu0
    %v637 = vpop.trf.xlu0
    %v638 = vpop.trf.xlu0
    %v639 = vpop.trf.xlu0
    %v640 = vpop.trf.xlu0
    %v641 = vpop.trf.xlu0
    %v642 = vpop.trf.xlu0
    %v643 = vpop.trf.xlu0
    %v644 = vpop.trf.xlu0
    %645 = vxpose.xlu0.b32.start [1/16] %v420, 128
    %646 = vxpose.xlu0.b32.cont [2/16] 0.0, 128
    %647 = vxpose.xlu0.b32.cont [3/16] 0.0, 128
    %648 = vxpose.xlu0.b32.cont [4/16] 0.0, 128
    %649 = vxpose.xlu0.b32.cont [5/16] 0.0, 128
    %650 = vxpose.xlu0.b32.cont [6/16] 0.0, 128
    %651 = vxpose.xlu0.b32.cont [7/16] 0.0, 128
    %652 = vxpose.xlu0.b32.cont [8/16] 0.0, 128
    %653 = vxpose.xlu0.b32.cont [9/16] 0.0, 128
    %654 = vxpose.xlu0.b32.cont [10/16] 0.0, 128
    %655 = vxpose.xlu0.b32.cont [11/16] 0.0, 128
    %656 = vxpose.xlu0.b32.cont [12/16] 0.0, 128
    %657 = vxpose.xlu0.b32.cont [13/16] 0.0, 128
    %658 = vxpose.xlu0.b32.cont [14/16] 0.0, 128
    %659 = vxpose.xlu0.b32.cont [15/16] 0.0, 128
    %660 = vxpose.xlu0.b32.end [16/16] 0.0, 128
    %v661 = vpop.trf.xlu0
    %v662 = vpop.trf.xlu0
    %v663 = vpop.trf.xlu0
    %v664 = vpop.trf.xlu0
    %v665 = vpop.trf.xlu0
    %v666 = vpop.trf.xlu0
    %v667 = vpop.trf.xlu0
    %v668 = vpop.trf.xlu0
    %v669 = vpop.trf.xlu0
    %v670 = vpop.trf.xlu0
    %v671 = vpop.trf.xlu0
    %v672 = vpop.trf.xlu0
    %v673 = vpop.trf.xlu0
    %v674 = vpop.trf.xlu0
    %v675 = vpop.trf.xlu0
    %v676 = vpop.trf.xlu0
    %vm677 = vcmask 36864
    %678 = vst.msk [vmem:[%s1] sm:$0x1f] %vm677, %v437
    %679 = vst.msk [vmem:[%s1 + $0x8] sm:$0x1f] %vm677, %v469
    %680 = vst.msk [vmem:[%s1 + $0x10] sm:$0x1f] %vm677, %v501
    %681 = vst.msk [vmem:[%s1 + $0x18] sm:$0x1f] %vm677, %v533
    %682 = vst.msk [vmem:[%s1 + $0x20] sm:$0x1f] %vm677, %v565
    %683 = vst.msk [vmem:[%s1 + $0x28] sm:$0x1f] %vm677, %v597
    %684 = vst.msk [vmem:[%s1 + $0x30] sm:$0x1f] %vm677, %v629
    %685 = vst.msk [vmem:[%s1 + $0x38] sm:$0x1f] %vm677, %v661
    // Predicated region
    $region10: #{fn.1} parent=1 // pred_check
      _
    $region11: #{fn.1} parent=1 // pred_check_branch
      %687 = sbr.rel (0) target = $region13
    $region12: #{fn.1} parent=1 // pred_region
      _
    $region13: #{fn.1} parent=1 // pred_fallthru
      _
    // Predicated region
    $region14: #{fn.1} parent=1 // pred_check
      _
    $region15: #{fn.1} parent=1 // pred_check_branch
      %689 = sbr.rel (0) target = $region17
    $region16: #{fn.1} parent=1 // pred_region
      _
    $region17: #{fn.1} parent=1 // pred_fallthru
      _
    %690 = vsyncpa [#allocation4], 1

// kernel: fn.1
$region0: #{fn.1}
  #allocation0 [shape = 'u32[]', space=smem, size = 0x4, offset = 0x4, fixed_abs, tag = 'smem constant byte address 0x4 - core index']
  #allocation1 [shape = 'u32[144,128]{1,0:T(1,128)}', space=vmem, size = 0x12000, scoped, tag = 'internal scratch']
  #allocation2 [shape = 'f32[8,16,5]{2,1,0:T(8,128)}', space=vmem, size = 0x10000, scoped, tag = 'scratch operand']
  %s0 = inlined_call_operand.hbm [shape: f32[8,16,16], index: 0, kind: input, shape index: {}]
  %s1 = inlined_call_operand.vmem [shape: f32[8,5,5], index: 1, kind: output, shape index: {}]
  %s2 = sld [smem:[#allocation0]]
  $region18: #{fn.1} parent=0
    _
  %s4 = ssub.s32 1, %s2
  %s5 = scalar_select 0, %s4, %s2
  $region1: #{fn.1} parent=0
    #allocation3 [shape = 'u8[65536]{0}', space=vmem, size = 0x10000, scoped, tag = 'input window, operand 0, single buffered']
    #allocation4 [shape = 's32[1]{0}', space=sflag, size = 0x4, scoped, tag = 'scoped memory for fn.1']
    %6 = vsyncpa [#allocation4], 0
    // Predicated region
    $region2: #{fn.1} parent=1 // pred_check
      _
    $region3: #{fn.1} parent=1 // pred_check_branch
      %8 = sbr.rel (0) target = $region5
    $region4: #{fn.1} parent=1 // pred_region
      %s10 = ssub.s32 2048, 2048
      %11 = vsyncadd [#allocation4], %s10
      %s12 = sshll.u32 [#allocation3], 4
      %s13 = int_to_ptr.vmem [resolvable:$true] %s12
      %18 = dma.hbm_to_vmem [thread:$0]  %s0, 2048, %s13, [#allocation4], 128, 128, 8
    $region5: #{fn.1} parent=1 // pred_fallthru
      _
    // Predicated region
    $region6: #{fn.1} parent=1 // pred_check
      _
    $region7: #{fn.1} parent=1 // pred_check_branch
      %20 = sbr.rel (0) target = $region9
    $region8: #{fn.1} parent=1 // pred_region
      %21 = dma.done [#allocation4], 2048
    $region9: #{fn.1} parent=1 // pred_fallthru
      _
    %v22 = vld [vmem:[#allocation3] sm:$0xff]
    %v23 = vld [vmem:[#allocation3 + $0x8] sm:$0xff]
    %v24 = vld [vmem:[#allocation3 + $0x10] sm:$0xff]
    %v25 = vld [vmem:[#allocation3 + $0x18] sm:$0xff]
    %v26 = vld [vmem:[#allocation3 + $0x20] sm:$0xff]
    %v27 = vld [vmem:[#allocation3 + $0x28] sm:$0xff]
    %v28 = vld [vmem:[#allocation3 + $0x30] sm:$0xff]
    %v29 = vld [vmem:[#allocation3 + $0x38] sm:$0xff]
    %v30 = vld [vmem:[#allocation3 + $0x40] sm:$0xff]
    %v31 = vld [vmem:[#allocation3 + $0x48] sm:$0xff]
    %v32 = vld [vmem:[#allocation3 + $0x50] sm:$0xff]
    %v33 = vld [vmem:[#allocation3 + $0x58] sm:$0xff]
    %v34 = vld [vmem:[#allocation3 + $0x60] sm:$0xff]
    %v35 = vld [vmem:[#allocation3 + $0x68] sm:$0xff]
    %v36 = vld [vmem:[#allocation3 + $0x70] sm:$0xff]
    %v37 = vld [vmem:[#allocation3 + $0x78] sm:$0xff]
    %v46 = vrot.slane %v22, 1
    %v47 = vrot.slane %v24, 1
    %v48 = vrot.slane %v26, 1
    %v49 = vrot.slane %v28, 1
    %v50 = vrot.slane %v30, 1
    %v51 = vrot.slane %v32, 1
    %v52 = vrot.slane %v34, 1
    %v53 = vrot.slane %v36, 1
    %v62 = vmax.f32 %v22, %v46
    %v63 = vmax.f32 %v24, %v47
    %v64 = vmax.f32 %v26, %v48
    %v65 = vmax.f32 %v28, %v49
    %v66 = vmax.f32 %v30, %v50
    %v67 = vmax.f32 %v32, %v51
    %v68 = vmax.f32 %v34, %v52
    %v69 = vmax.f32 %v36, %v53
    %v70 = vrot.slane %v22, 2
    %v71 = vrot.slane %v24, 2
    %v72 = vrot.slane %v26, 2
    %v73 = vrot.slane %v28, 2
    %v74 = vrot.slane %v30, 2
    %v75 = vrot.slane %v32, 2
    %v76 = vrot.slane %v34, 2
    %v77 = vrot.slane %v36, 2
    %v86 = vmax.f32 %v62, %v70
    %v87 = vmax.f32 %v63, %v71
    %v88 = vmax.f32 %v64, %v72
    %v89 = vmax.f32 %v65, %v73
    %v90 = vmax.f32 %v66, %v74
    %v91 = vmax.f32 %v67, %v75
    %v92 = vmax.f32 %v68, %v76
    %v93 = vmax.f32 %v69, %v77
    %v102 = vrot.slane %v23, 2
    %v103 = vrot.slane %v25, 2
    %v104 = vrot.slane %v27, 2
    %v105 = vrot.slane %v29, 2
    %v106 = vrot.slane %v31, 2
    %v107 = vrot.slane %v33, 2
    %v108 = vrot.slane %v35, 2
    %v109 = vrot.slane %v37, 2
    %v118 = vmax.f32 %v62, %v102
    %v119 = vmax.f32 %v63, %v103
    %v120 = vmax.f32 %v64, %v104
    %v121 = vmax.f32 %v65, %v105
    %v122 = vmax.f32 %v66, %v106
    %v123 = vmax.f32 %v67, %v107
    %v124 = vmax.f32 %v68, %v108
    %v125 = vmax.f32 %v69, %v109
    %v126 = vrot.slane %v23, 1
    %v127 = vrot.slane %v25, 1
    %v128 = vrot.slane %v27, 1
    %v129 = vrot.slane %v29, 1
    %v130 = vrot.slane %v31, 1
    %v131 = vrot.slane %v33, 1
    %v132 = vrot.slane %v35, 1
    %v133 = vrot.slane %v37, 1
    %v142 = vmax.f32 %v23, %v126
    %v143 = vmax.f32 %v25, %v127
    %v144 = vmax.f32 %v27, %v128
    %v145 = vmax.f32 %v29, %v129
    %v146 = vmax.f32 %v31, %v130
    %v147 = vmax.f32 %v33, %v131
    %v148 = vmax.f32 %v35, %v132
    %v149 = vmax.f32 %v37, %v133
    %v150 = vmax.f32 %v142, %v102
    %v151 = vmax.f32 %v143, %v103
    %v152 = vmax.f32 %v144, %v104
    %v153 = vmax.f32 %v145, %v105
    %v154 = vmax.f32 %v146, %v106
    %v155 = vmax.f32 %v147, %v107
    %v156 = vmax.f32 %v148, %v108
    %v157 = vmax.f32 %v149, %v109
    %v166 = vrot.slane %v86, 2
    %v167 = vrot.slane %v87, 2
    %v168 = vrot.slane %v88, 2
    %v169 = vrot.slane %v89, 2
    %v170 = vrot.slane %v90, 2
    %v171 = vrot.slane %v91, 2
    %v172 = vrot.slane %v92, 2
    %v173 = vrot.slane %v93, 2
    %v190 = vrot.slane %v118, 4
    %v191 = vrot.slane %v119, 4
    %v192 = vrot.slane %v120, 4
    %v193 = vrot.slane %v121, 4
    %v194 = vrot.slane %v122, 4
    %v195 = vrot.slane %v123, 4
    %v196 = vrot.slane %v124, 4
    %v197 = vrot.slane %v125, 4
    %v214 = vrot.slane %v150, 6
    %v215 = vrot.slane %v151, 6
    %v216 = vrot.slane %v152, 6
    %v217 = vrot.slane %v153, 6
    %v218 = vrot.slane %v154, 6
    %v219 = vrot.slane %v155, 6
    %v220 = vrot.slane %v156, 6
    %v221 = vrot.slane %v157, 6
    %vm230 = vcmask 1040384
    %v231 = vsel %vm230, %v86, %v166
    %v232 = vsel %vm230, %v87, %v167
    %v233 = vsel %vm230, %v88, %v168
    %v234 = vsel %vm230, %v89, %v169
    %v235 = vsel %vm230, %v90, %v170
    %v236 = vsel %vm230, %v91, %v171
    %v237 = vsel %vm230, %v92, %v172
    %v238 = vsel %vm230, %v93, %v173
    %vm239 = vcmask 1041408
    %v240 = vsel %vm239, %v231, %v190
    %v241 = vsel %vm239, %v232, %v191
    %v242 = vsel %vm239, %v233, %v192
    %v243 = vsel %vm239, %v234, %v193
    %v244 = vsel %vm239, %v235, %v194
    %v245 = vsel %vm239, %v236, %v195
    %v246 = vsel %vm239, %v237, %v196
    %v247 = vsel %vm239, %v238, %v197
    %vm248 = vcmask 1042432
    %v249 = vsel %vm248, %v240, %v214
    %v250 = vsel %vm248, %v241, %v215
    %v251 = vsel %vm248, %v242, %v216
    %v252 = vsel %vm248, %v243, %v217
    %v253 = vsel %vm248, %v244, %v218
    %v254 = vsel %vm248, %v245, %v219
    %v255 = vsel %vm248, %v246, %v220
    %v256 = vsel %vm248, %v247, %v221
    %vm257 = vcmask 1043456
    %v258 = vsel %vm257, %v249, %v150
    %v259 = vsel %vm257, %v250, %v151
    %v260 = vsel %vm257, %v251, %v152
    %v261 = vsel %vm257, %v252, %v153
    %v262 = vsel %vm257, %v253, %v154
    %v263 = vsel %vm257, %v254, %v155
    %v264 = vsel %vm257, %v255, %v156
    %v265 = vsel %vm257, %v256, %v157
    %274 = vrot.lane.b32.xlu0 %v258, 127
    %v275 = vpop.permute.xlu0 %274
    %276 = vrot.lane.b32.xlu0 %v259, 127
    %v277 = vpop.permute.xlu0 %276
    %278 = vrot.lane.b32.xlu0 %v260, 127
    %v279 = vpop.permute.xlu0 %278
    %280 = vrot.lane.b32.xlu0 %v261, 127
    %v281 = vpop.permute.xlu0 %280
    %282 = vrot.lane.b32.xlu0 %v262, 127
    %v283 = vpop.permute.xlu0 %282
    %284 = vrot.lane.b32.xlu0 %v263, 127
    %v285 = vpop.permute.xlu0 %284
    %286 = vrot.lane.b32.xlu0 %v264, 127
    %v287 = vpop.permute.xlu0 %286
    %288 = vrot.lane.b32.xlu0 %v265, 127
    %v289 = vpop.permute.xlu0 %288
    %v298 = vmax.f32 %v258, %v275
    %v299 = vmax.f32 %v259, %v277
    %v300 = vmax.f32 %v260, %v279
    %v301 = vmax.f32 %v261, %v281
    %v302 = vmax.f32 %v262, %v283
    %v303 = vmax.f32 %v263, %v285
    %v304 = vmax.f32 %v264, %v287
    %v305 = vmax.f32 %v265, %v289
    %306 = vrot.lane.b32.xlu0 %v258, 126
    %v307 = vpop.permute.xlu0 %306
    %308 = vrot.lane.b32.xlu0 %v259, 126
    %v309 = vpop.permute.xlu0 %308
    %310 = vrot.lane.b32.xlu0 %v260, 126
    %v311 = vpop.permute.xlu0 %310
    %312 = vrot.lane.b32.xlu0 %v261, 126
    %v313 = vpop.permute.xlu0 %312
    %314 = vrot.lane.b32.xlu0 %v262, 126
    %v315 = vpop.permute.xlu0 %314
    %316 = vrot.lane.b32.xlu0 %v263, 126
    %v317 = vpop.permute.xlu0 %316
    %318 = vrot.lane.b32.xlu0 %v264, 126
    %v319 = vpop.permute.xlu0 %318
    %320 = vrot.lane.b32.xlu0 %v265, 126
    %v321 = vpop.permute.xlu0 %320
    %v330 = vmax.f32 %v298, %v307
    %v331 = vmax.f32 %v299, %v309
    %v332 = vmax.f32 %v300, %v311
    %v333 = vmax.f32 %v301, %v313
    %v334 = vmax.f32 %v302, %v315
    %v335 = vmax.f32 %v303, %v317
    %v336 = vmax.f32 %v304, %v319
    %v337 = vmax.f32 %v305, %v321
    %346 = vrot.lane.b32.xlu0 %v330, 126
    %v347 = vpop.permute.xlu0 %346
    %348 = vrot.lane.b32.xlu0 %v331, 126
    %v349 = vpop.permute.xlu0 %348
    %350 = vrot.lane.b32.xlu0 %v332, 126
    %v351 = vpop.permute.xlu0 %350
    %352 = vrot.lane.b32.xlu0 %v333, 126
    %v353 = vpop.permute.xlu0 %352
    %354 = vrot.lane.b32.xlu0 %v334, 126
    %v355 = vpop.permute.xlu0 %354
    %356 = vrot.lane.b32.xlu0 %v335, 126
    %v357 = vpop.permute.xlu0 %356
    %358 = vrot.lane.b32.xlu0 %v336, 126
    %v359 = vpop.permute.xlu0 %358
    %360 = vrot.lane.b32.xlu0 %v337, 126
    %v361 = vpop.permute.xlu0 %360
    %370 = vrot.lane.b32.xlu0 %v330, 124
    %v371 = vpop.permute.xlu0 %370
    %372 = vrot.lane.b32.xlu0 %v331, 124
    %v373 = vpop.permute.xlu0 %372
    %374 = vrot.lane.b32.xlu0 %v332, 124
    %v375 = vpop.permute.xlu0 %374
    %376 = vrot.lane.b32.xlu0 %v333, 124
    %v377 = vpop.permute.xlu0 %376
    %378 = vrot.lane.b32.xlu0 %v334, 124
    %v379 = vpop.permute.xlu0 %378
    %380 = vrot.lane.b32.xlu0 %v335, 124
    %v381 = vpop.permute.xlu0 %380
    %382 = vrot.lane.b32.xlu0 %v336, 124
    %v383 = vpop.permute.xlu0 %382
    %384 = vrot.lane.b32.xlu0 %v337, 124
    %v385 = vpop.permute.xlu0 %384
    %394 = vrot.lane.b32.xlu0 %v330, 122
    %v395 = vpop.permute.xlu0 %394
    %396 = vrot.lane.b32.xlu0 %v331, 122
    %v397 = vpop.permute.xlu0 %396
    %398 = vrot.lane.b32.xlu0 %v332, 122
    %v399 = vpop.permute.xlu0 %398
    %400 = vrot.lane.b32.xlu0 %v333, 122
    %v401 = vpop.permute.xlu0 %400
    %402 = vrot.lane.b32.xlu0 %v334, 122
    %v403 = vpop.permute.xlu0 %402
    %404 = vrot.lane.b32.xlu0 %v335, 122
    %v405 = vpop.permute.xlu0 %404
    %406 = vrot.lane.b32.xlu0 %v336, 122
    %v407 = vpop.permute.xlu0 %406
    %408 = vrot.lane.b32.xlu0 %v337, 122
    %v409 = vpop.permute.xlu0 %408
    %418 = vrot.lane.b32.xlu0 %v330, 120
    %v419 = vpop.permute.xlu0 %418
    %420 = vrot.lane.b32.xlu0 %v331, 120
    %v421 = vpop.permute.xlu0 %420
    %422 = vrot.lane.b32.xlu0 %v332, 120
    %v423 = vpop.permute.xlu0 %422
    %424 = vrot.lane.b32.xlu0 %v333, 120
    %v425 = vpop.permute.xlu0 %424
    %426 = vrot.lane.b32.xlu0 %v334, 120
    %v427 = vpop.permute.xlu0 %426
    %428 = vrot.lane.b32.xlu0 %v335, 120
    %v429 = vpop.permute.xlu0 %428
    %430 = vrot.lane.b32.xlu0 %v336, 120
    %v431 = vpop.permute.xlu0 %430
    %432 = vrot.lane.b32.xlu0 %v337, 120
    %v433 = vpop.permute.xlu0 %432
    %vm442 = vcmask 7168
    %v443 = vsel %vm442, %v330, %v347
    %v444 = vsel %vm442, %v331, %v349
    %v445 = vsel %vm442, %v332, %v351
    %v446 = vsel %vm442, %v333, %v353
    %v447 = vsel %vm442, %v334, %v355
    %v448 = vsel %vm442, %v335, %v357
    %v449 = vsel %vm442, %v336, %v359
    %v450 = vsel %vm442, %v337, %v361
    %vm451 = vcmask 15360
    %v452 = vsel %vm451, %v443, %v371
    %v453 = vsel %vm451, %v444, %v373
    %v454 = vsel %vm451, %v445, %v375
    %v455 = vsel %vm451, %v446, %v377
    %v456 = vsel %vm451, %v447, %v379
    %v457 = vsel %vm451, %v448, %v381
    %v458 = vsel %vm451, %v449, %v383
    %v459 = vsel %vm451, %v450, %v385
    %vm460 = vcmask 23552
    %v461 = vsel %vm460, %v452, %v395
    %v462 = vsel %vm460, %v453, %v397
    %v463 = vsel %vm460, %v454, %v399
    %v464 = vsel %vm460, %v455, %v401
    %v465 = vsel %vm460, %v456, %v403
    %v466 = vsel %vm460, %v457, %v405
    %v467 = vsel %vm460, %v458, %v407
    %v468 = vsel %vm460, %v459, %v409
    %vm469 = vcmask 31744
    %v470 = vsel %vm469, %v461, %v419
    %v471 = vsel %vm469, %v462, %v421
    %v472 = vsel %vm469, %v463, %v423
    %v473 = vsel %vm469, %v464, %v425
    %v474 = vsel %vm469, %v465, %v427
    %v475 = vsel %vm469, %v466, %v429
    %v476 = vsel %vm469, %v467, %v431
    %v477 = vsel %vm469, %v468, %v433
    %vm478 = vcmask 36864
    %479 = vst.msk [vmem:[%s1] sm:$0x1f] %vm478, %v470
    %480 = vst.msk [vmem:[%s1 + $0x8] sm:$0x1f] %vm478, %v471
    %481 = vst.msk [vmem:[%s1 + $0x10] sm:$0x1f] %vm478, %v472
    %482 = vst.msk [vmem:[%s1 + $0x18] sm:$0x1f] %vm478, %v473
    %483 = vst.msk [vmem:[%s1 + $0x20] sm:$0x1f] %vm478, %v474
    %484 = vst.msk [vmem:[%s1 + $0x28] sm:$0x1f] %vm478, %v475
    %485 = vst.msk [vmem:[%s1 + $0x30] sm:$0x1f] %vm478, %v476
    %486 = vst.msk [vmem:[%s1 + $0x38] sm:$0x1f] %vm478, %v477
    // Predicated region
    $region10: #{fn.1} parent=1 // pred_check
      _
    $region11: #{fn.1} parent=1 // pred_check_branch
      %488 = sbr.rel (0) target = $region13
    $region12: #{fn.1} parent=1 // pred_region
      _
    $region13: #{fn.1} parent=1 // pred_fallthru
      _
    // Predicated region
    $region14: #{fn.1} parent=1 // pred_check
      _
    $region15: #{fn.1} parent=1 // pred_check_branch
      %490 = sbr.rel (0) target = $region17
    $region16: #{fn.1} parent=1 // pred_region
      _
    $region17: #{fn.1} parent=1 // pred_fallthru
      _
    %491 = vsyncpa [#allocation4], 1

</llo_original>
